<compile_context>
chip_gen: v6e
topology: v6e:2x2x1
jax: 0.10.0
libtpu: 0.0.40
codegen_flags: <defaults>
</compile_context>

<pallas_src>
import functools

import numpy as np
import jax
import jax.numpy as jnp
from jax import lax
from jax.experimental import pallas as pl
from jax.experimental.pallas import tpu as pltpu

# ----------------------------------------------------------------------------
# Constants from the PyTorch module
# ----------------------------------------------------------------------------
Neurons = ['objects', 'shape', 'material', 'color', 'cube', 'cylinder', 'sphere',
           'rubber', 'metal', 'gray', 'red', 'blue', 'green', 'brown', 'purple',
           'cyan', 'yellow', 'count', 'belong', 'belong_gate', 'o_ex_gate',
           'o_inh_gate', 'o_copy_fun', 'o_inh_fun', 'o_mov_fun', 'o_sta_fun',
           'o_att_fun', 'o', 'o_copy', 'o_inh', 'o_mov', 'o_sta', 'o_att',
           'events', 'start', 'end', 'e_ex_gate', 'e_inh_gate', 'e_copy_fun',
           'e_in_fun', 'e_out_fun', 'e_col_fun', 'e_ancestor_fun', 'e_before_fun',
           'e_after_fun', 'e_first_fun', 'e_second_fun', 'e_last_fun', 'e',
           'e_copy', 'e_att', 'e_ancestor', 'e_before', 'e_after']

O_attrs = {'shape': ['cube', 'cylinder', 'sphere'],
           'material': ['rubber', 'metal'],
           'color': ['gray', 'red', 'blue', 'green', 'brown', 'purple', 'cyan', 'yellow']}

Sub = 1
Thr = 100
DECAY = 0.0  # SRN.decay


# ----------------------------------------------------------------------------
# Plain-Python glue: faithful transcription of SRN.sequence2connection
# ----------------------------------------------------------------------------
def sequence2connection(seq):
    num_objects = len(seq['objects'])
    num_events = len(seq['events'])
    num_neurons = len(Neurons) + 6 * (num_objects - 1) + 6 * (num_events - 1)
    c = np.zeros((num_neurons, num_neurons), dtype=np.int32)
    N = {}
    tmp = Neurons.index('events')
    for i in range(len(Neurons)):
        if i < tmp:
            N[Neurons[i]] = i
        else:
            N[Neurons[i]] = i + 6 * (num_objects - 1)
    for key in O_attrs:
        for attr in O_attrs[key]:
            c[N[key]][N[attr]] = Thr - Sub
    for o in range(num_objects):
        c[N['objects']][N['o'] + 6 * o] = Thr
        c[N['o'] + 6 * o][N['o'] + 6 * o] = Thr
        c[N['o_ex_gate']][N['o'] + 6 * o] = Thr - Sub
        c[N['o_inh_gate']][N['o'] + 6 * o] = -Sub
        c[N['o'] + 6 * o][N['count']] = Sub
        c[N['o_copy_fun']][N['o_copy'] + 6 * o] = Thr - Sub
        c[N['o'] + 6 * o][N['o_copy'] + 6 * o] = Sub
        c[N['o_copy'] + 6 * o][N['o_copy'] + 6 * o] = Thr
        c[N['belong_gate']][N['o_copy'] + 6 * o] = -Sub
        c[N['o_att'] + 6 * o][N['o_copy'] + 6 * o] = Sub
        c[N['o_copy'] + 6 * o][N['belong']] = Sub
        c[N['o_inh_fun']][N['o_inh'] + 6 * o] = Thr - Sub
        c[N['o'] + 6 * o][N['o_inh'] + 6 * o] = Sub
        c[N['o_inh'] + 6 * o][N['o'] + 6 * o] = -Thr
        c[N['o_mov_fun']][N['o_mov'] + 6 * o] = Thr - Sub
        c[N['o_mov'] + 6 * o][N['o'] + 6 * o] = Sub
        c[N['o_sta_fun']][N['o_sta'] + 6 * o] = Thr
        c[N['o_sta'] + 6 * o][N['o'] + 6 * o] = Sub
        c[N['o_att_fun']][N['o_att'] + 6 * o] = Thr - Sub
        c[N['o_att'] + 6 * o][N['o'] + 6 * o] = Sub
    for e in range(num_events):
        c[N['events']][N['e'] + 6 * e] = Thr
        c[N['e'] + 6 * e][N['e'] + 6 * e] = Thr
        c[N['e_ex_gate']][N['e'] + 6 * e] = Thr - Sub
        c[N['e_inh_gate']][N['e'] + 6 * e] = -Sub
        c[N['e'] + 6 * e][N['count']] = Sub
        c[N['e_copy_fun']][N['e_copy'] + 6 * e] = Thr - Sub
        c[N['e'] + 6 * e][N['e_copy'] + 6 * e] = Sub
        c[N['e_copy'] + 6 * e][N['e_copy'] + 6 * e] = Thr
        c[N['belong_gate']][N['e_copy'] + 6 * e] = -Sub
        c[N['e_copy'] + 6 * e][N['belong']] = Sub
        c[N['e_att'] + 6 * e][N['e'] + 6 * e] = Sub
        c[N['e_ancestor_fun']][N['e_ancestor'] + 6 * e] = Thr - Sub
        c[N['e_ancestor'] + 6 * e][N['e'] + 6 * e] = Sub
        c[N['e_before_fun']][N['e_before'] + 6 * e] = Thr
        c[N['e_first_fun']][N['e_before'] + 6 * e] = Thr + Sub
        c[N['e_second_fun']][N['e_before'] + 6 * e] = Thr + Sub * 2
        c[N['e_after_fun']][N['e_after'] + 6 * e] = Thr
        c[N['e_last_fun']][N['e_after'] + 6 * e] = Thr + Sub
        c[N['e_before'] + 6 * e][N['e'] + 6 * e] = Sub
        c[N['e_after'] + 6 * e][N['e'] + 6 * e] = Sub
        for ee in range(e + 1):
            c[N['e'] + 6 * ee][N['e_before'] + 6 * e] = -Sub
            c[N['e'] + 6 * e][N['e_after'] + 6 * ee] = -Sub
    for o, obj in enumerate(seq['objects']):
        for key in O_attrs.keys():
            c[N['o'] + 6 * o][N[obj[key]]] = Sub
            c[N[obj[key]]][N['o'] + 6 * o] = Sub
    for e, eve in enumerate(seq['events']):
        if eve['type'] in ['start', 'end']:
            c[N[eve['type']]][N['e'] + 6 * e] = Sub
        for obj in eve['object']:
            c[N['e'] + 6 * e][N['o_att'] + 6 * obj] = Sub
            c[N['o'] + 6 * obj][N['e_att'] + 6 * e] = Sub
        if eve['type'] == 'in':
            c[N['e_in_fun']][N['e_att'] + 6 * e] = Thr - Sub
        elif eve['type'] == 'out':
            c[N['e_out_fun']][N['e_att'] + 6 * e] = Thr - Sub
        elif eve['type'] == 'collision':
            c[N['e_col_fun']][N['e_att'] + 6 * e] = Thr - Sub
        for obj in eve['moving']:
            c[N['e'] + 6 * e][N['o_mov'] + 6 * obj] = Sub
        for o in range(num_objects):
            c[N['e'] + 6 * e][N['o_sta'] + 6 * o] = -Sub
        for obj in eve['stationary']:
            c[N['e'] + 6 * e][N['o_sta'] + 6 * obj] = 0
    square = []
    for e in range(num_events):
        line = []
        for ee in range(e):
            for obj in seq['events'][e]['object']:
                if obj in seq['events'][ee]['object']:
                    line.append(ee)
                    line.extend(square[ee])
        square.append(line)
    for e, line in enumerate(square):
        for ee in line:
            c[N['e'] + 6 * e][N['e_ancestor'] + 6 * ee] = Sub
    return c, N


def to_instructions(p):
    p = list(p)
    instructions = []
    p_idx = len(p)
    while p_idx:
        p_idx = p_idx - 1
        if 'filter' in p[p_idx]:
            if p[p_idx].split('_')[1] in ['color', 'material', 'shape', 'order']:
                p_idx = p_idx - 1
                p[p_idx] = 'filter_' + p[p_idx]
        instructions.append(p[p_idx])
    instructions.reverse()
    p = instructions
    if 'query_frame' in p:
        a = p.index('events')
        b = p.index('query_frame') + 1
        p = p[a:b] + p[:a] + p[b:]
    instructions = []
    for a in p:
        if a not in ['unique', 'query_frame']:
            instructions.append(a)
    if 'filter_stationary' in instructions or 'filter_moving' in instructions:
        if instructions[0] != 'events':
            instructions = ['events'] + instructions
    return instructions


def program2stimuli(programs, N, num_neurons):
    instructions = to_instructions(programs)
    stimuli = [[0] * num_neurons]
    i = len(instructions)
    while i:
        i = i - 1
        stimuli.append([0] * num_neurons)
        stimuli.append([0] * num_neurons)
        if instructions[i].startswith('filter'):
            fil = instructions[i].split('_')[-1]
            if fil in O_attrs['shape'] + O_attrs['material'] + O_attrs['color']:
                stimuli[-1][N[fil]] = 2 * Thr
                stimuli[-1][N['o_inh_gate']] = Thr
            elif fil == 'moving':
                stimuli[-1][N['o_inh_gate']] = Thr
                stimuli[-1][N['e_inh_gate']] = Thr
                stimuli.append([0] * num_neurons)
                stimuli[-1][N['o_mov_fun']] = Thr
            elif fil == 'stationary':
                stimuli[-1][N['o_inh_gate']] = Thr
                stimuli[-1][N['e_inh_gate']] = Thr
                stimuli.append([0] * num_neurons)
                stimuli[-1][N['o_sta_fun']] = Thr
            elif fil in ['start', 'end']:
                stimuli[-1][N[fil]] = Thr
                stimuli[-1][N['e_inh_gate']] = Thr
            elif fil == 'in':
                stimuli[-1][N['e_inh_gate']] = Thr
                stimuli[-1][N['o_inh_gate']] = Thr
                stimuli.append([0] * num_neurons)
                stimuli[-1][N['e_in_fun']] = Thr
            elif fil == 'out':
                stimuli[-1][N['e_inh_gate']] = Thr
                stimuli[-1][N['o_inh_gate']] = Thr
                stimuli.append([0] * num_neurons)
                stimuli[-1][N['e_out_fun']] = Thr
            elif fil == 'collision':
                stimuli[-1][N['e_inh_gate']] = Thr
                stimuli[-1][N['o_inh_gate']] = Thr
                stimuli.append([0] * num_neurons)
                stimuli[-1][N['e_col_fun']] = Thr
            elif fil == 'ancestor':
                stimuli[-1][N['e_ex_gate']] = Thr
                stimuli.append([0] * num_neurons)
                stimuli[-1][N['e_ancestor_fun']] = Thr
                stimuli[-1][N['e_inh_gate']] = Thr
            elif fil == 'before':
                stimuli[-1][N['e_ex_gate']] = Thr
                stimuli.append([0] * num_neurons)
                stimuli[-1][N['e_before_fun']] = Thr
                stimuli[-1][N['e_inh_gate']] = Thr
            elif fil == 'after':
                stimuli[-1][N['e_ex_gate']] = Thr
                stimuli.append([0] * num_neurons)
                stimuli[-1][N['e_after_fun']] = Thr
                stimuli[-1][N['e_inh_gate']] = Thr
            elif fil == 'first':
                stimuli[-1][N['e_inh_gate']] = Thr
                stimuli.append([0] * num_neurons)
                stimuli[-1][N['e_first_fun']] = Thr
            elif fil == 'last':
                stimuli[-1][N['e_inh_gate']] = Thr
                stimuli.append([0] * num_neurons)
                stimuli[-1][N['e_last_fun']] = Thr
            elif fil == 'second':
                stimuli[-1][N['e_inh_gate']] = Thr
                stimuli.append([0] * num_neurons)
                stimuli[-1][N['e_last_fun']] = Thr
                stimuli.append([0] * num_neurons)
                stimuli.append([0] * num_neurons)
                stimuli[-1][N['e_inh_gate']] = Thr
                stimuli.append([0] * num_neurons)
                stimuli[-1][N['e_second_fun']] = Thr
        elif instructions[i].startswith('query'):
            query = instructions[i].split('_')[-1]
            if query in O_attrs.keys():
                stimuli.pop()
                stimuli[-1][N[query]] = Thr
            elif query == 'object':
                stimuli[-1][N['o_ex_gate']] = Thr
                stimuli.append([0] * num_neurons)
                stimuli[-1][N['o_att_fun']] = Thr
            elif query == 'partner':
                stimuli[-1][N['o_ex_gate']] = Thr
                stimuli.append([0] * num_neurons)
                stimuli[-1][N['o_att_fun']] = Thr
                stimuli[-1][N['o_inh_fun']] = Thr
                stimuli[-1][N['o_inh_gate']] = Thr
        elif instructions[i] == 'belong_to':
            stimuli[-1][N['belong_gate']] = Thr
            stimuli.append([0] * num_neurons)
            stimuli[-1][N['o_att_fun']] = Thr
        elif instructions[i] == 'events':
            stimuli[-1][N['events']] = Thr
            if i and instructions[i - 1] == 'events':
                i = i - 1
                stimuli[-1][N['o_copy_fun']] = Thr
                stimuli[-1][N['e_copy_fun']] = Thr
        elif instructions[i] == 'objects':
            stimuli[-1][N['objects']] = Thr
    # torch: tensor(stimuli).flip(0).unsqueeze(2) -> here (T, num_neurons)
    return np.flip(np.array(stimuli, dtype=np.int32), 0).copy()


def mem2pred(mem, quest, N):
    if quest == 'count':
        return str(int(mem[N['count']]))
    elif quest == 'exist':
        return 'yes' if mem[N['count']] else 'no'
    elif quest == 'negate':
        return 'wrong' if int(mem[N['belong']]) else 'correct'
    elif quest == 'belong_to':
        return 'correct' if int(mem[N['belong']]) else 'wrong'
    elif quest == 'unseen' or quest == 'counter':
        return 'correct' if mem[N['count']] else 'wrong'
    elif quest == 'counter_negate':
        return 'wrong' if mem[N['count']] else 'correct'
    else:
        for attr in O_attrs[quest.split('_')[1]]:
            if mem[N[attr]] >= Thr:
                return attr


# ----------------------------------------------------------------------------
# Pallas kernel: the LIF recurrence (the compute hot path of SRN.forward)
# ----------------------------------------------------------------------------
def snn_kernel(x_ref, matT_ref, mem_ref, *, num_steps, decay, threshold):
    # x_ref:    (Tmax, Brow, Npad) f32   stimuli, time-major, batch on sublanes
    # matT_ref: (Npad, Npad)       bf16  transposed connection matrix (== C)
    # mem_ref:  (Brow, Npad)       f32   final membrane potentials
    matT = matT_ref[...]                              # hoisted: one load, reused

    def body(t, carry):
        mem, spike = carry                            # vreg-resident state
        xt = x_ref[t]                                 # (Brow, Npad) f32
        recur = jnp.dot(spike, matT,
                        preferred_element_type=jnp.float32)   # single bf16 MXU pass
        if decay == 0.0:
            # decay term specialized away at trace time (DECAY is a constant 0)
            new_mem = xt + recur
        else:
            new_mem = mem * decay * (1.0 - spike.astype(jnp.float32)) + xt + recur
        new_spike = (new_mem >= threshold).astype(jnp.bfloat16)
        return new_mem, new_spike

    mem0 = jnp.zeros(mem_ref.shape, jnp.float32)
    spike0 = jnp.zeros(mem_ref.shape, jnp.bfloat16)
    unroll = True if num_steps <= 64 else 8
    mem, _spike = lax.fori_loop(0, num_steps, body, (mem0, spike0), unroll=unroll)
    mem_ref[...] = mem                                # written exactly once


def snn_forward_pallas(mat, x_list):
    """mat: (n, n) int connection matrix (== SRN.c, i.e. con^T).
       x_list: list of (T_i, n) int stimuli (one per program).
       Returns final mem as (B, n) int32 (one row per program)."""
    mat = np.asarray(mat)
    n = mat.shape[0]
    B = len(x_list)
    Tmax = max(int(np.asarray(x).shape[0]) for x in x_list)

    Npad = max(128, ((n + 127) // 128) * 128)
    Brow = max(8, ((B + 7) // 8) * 8)

    # Front-pad shorter programs with zero stimuli: from the all-zero initial
    # state, leading zero steps leave (mem, spike) at zero, so results match
    # the per-program un-padded recurrence exactly.
    x_pad = np.zeros((Tmax, Brow, Npad), dtype=np.float32)
    for b, x in enumerate(x_list):
        x = np.asarray(x, dtype=np.float32)
        T = x.shape[0]
        x_pad[Tmax - T:, b, :n] = x

    # Weights (|w| <= Thr + 2*Sub) and 2*Thr stimuli are integers < 256, hence
    # exactly representable in bf16; products/accumulation stay exact in f32.
    matT_pad = np.zeros((Npad, Npad), dtype=np.float32)
    matT_pad[:n, :n] = mat.T.astype(np.float32)   # kernel computes spike_row @ mat^T

    kernel = functools.partial(snn_kernel, num_steps=Tmax,
                               decay=float(DECAY), threshold=float(Thr))
    mem = pl.pallas_call(
        kernel,
        grid=(1,),
        in_specs=[
            pl.BlockSpec((Tmax, Brow, Npad), lambda i: (0, 0, 0)),
            pl.BlockSpec((Npad, Npad), lambda i: (0, 0)),
        ],
        out_specs=pl.BlockSpec((Brow, Npad), lambda i: (0, 0)),
        out_shape=jax.ShapeDtypeStruct((Brow, Npad), jnp.float32),
        compiler_params=pltpu.CompilerParams(dimension_semantics=("arbitrary",)),
    )(jnp.asarray(x_pad), jnp.asarray(matT_pad, dtype=jnp.bfloat16))

    mem = jax.block_until_ready(mem)
    return np.asarray(mem)[:B, :n].astype(np.int32)


def snn_reference(mat, x):
    """Pure-numpy transcription of the torch loop (int semantics, decay=0)."""
    n = mat.shape[0]
    mem = np.zeros((n,), dtype=np.int64)
    spike = np.zeros((n,), dtype=np.int64)
    mat64 = mat.astype(np.int64)
    for xt in x.astype(np.int64):
        mem = mem * 0 * (1 - spike) + xt + mat64 @ spike
        spike = (mem >= Thr).astype(np.int64)
    return mem.astype(np.int32)


def srn_forward_batch(programs, con, N):
    """SRN.forward 'normal' path for a batch of programs:
       program -> stimuli -> SNN (one batched Pallas call) -> per-program mem."""
    # TODO(synk): the 'unseen_events' / 'filter_counterfact' branches need the
    # CLEVRER Simulation/Executor + scene pickle, which cannot be reproduced here.
    num_neurons = con.shape[0]
    mat = con.T                                         # == self.c = con.transpose(0, 1)
    xs = [program2stimuli(p, N, num_neurons) for p in programs]   # list of (T_i, n)
    mems = snn_forward_pallas(mat, xs)                  # hot path in Pallas, batched
    return mems, xs, mat


if __name__ == "__main__":
    # Deterministic synthetic scene (stands in for scene2sequence / pickle load).
    key = jax.random.PRNGKey(0)
    ks, km, kc = jax.random.split(key, 3)
    num_objects = 4
    shp = O_attrs['shape']
    mtl = O_attrs['material']
    col = O_attrs['color']
    si = np.asarray(jax.random.randint(ks, (num_objects,), 0, len(shp)))
    mi = np.asarray(jax.random.randint(km, (num_objects,), 0, len(mtl)))
    ci = np.asarray(jax.random.randint(kc, (num_objects,), 0, len(col)))
    objects = [{'shape': shp[int(si[o])], 'material': mtl[int(mi[o])],
                'color': col[int(ci[o])]} for o in range(num_objects)]
    events = [
        {'type': 'in', 'object': [0], 'moving': [0], 'stationary': [1, 2, 3]},
        {'type': 'collision', 'object': [0, 1], 'moving': [0, 1], 'stationary': [2, 3]},
        {'type': 'out', 'object': [1], 'moving': [1], 'stationary': [0, 2, 3]},
    ]
    seq = {'objects': objects, 'events': events}

    con, N = sequence2connection(seq)       # (84, 84) for 4 objects / 3 events

    # Batch of 8 descriptive programs -> fills all 8 sublane rows with real work.
    programs = [
        ['objects', 'cube', 'filter_shape', 'count'],
        ['objects', 'sphere', 'filter_shape', 'count'],
        ['objects', 'cylinder', 'filter_shape', 'count'],
        ['objects', 'metal', 'filter_material', 'exist'],
        ['objects', 'rubber', 'filter_material', 'count'],
        ['objects', 'red', 'filter_color', 'count'],
        ['objects', 'gray', 'filter_color', 'count'],
        ['objects', 'blue', 'filter_color', 'exist'],
    ]

    mems_kernel, xs, mat = srn_forward_batch(programs, con, N)

    # Check the Pallas recurrence against the exact numpy transcription,
    # program by program.
    for b, x in enumerate(xs):
        mem_ref = snn_reference(mat, x)
        assert np.array_equal(mems_kernel[b], mem_ref), (b, mems_kernel[b], mem_ref)

    # Semantic check on the count-the-cubes program.
    pred = mem2pred(mems_kernel[0], programs[0][-1], N)
    expected = str(sum(1 for o in objects if o['shape'] == 'cube'))
    assert pred == expected, (pred, expected)

    print("KERNEL_OK")
</pallas_src>

<mosaic_0001>
module attributes {stable_mosaic.version = 11 : i64} {
  func.func @snn_kernel(%arg0: i32, %arg1: memref<7x8x128xf32, #tpu.memory_space<vmem>>, %arg2: memref<128x128xbf16, #tpu.memory_space<vmem>>, %arg3: memref<8x128xf32, #tpu.memory_space<vmem>>) attributes {dimension_semantics = [#tpu.dimension_semantics<arbitrary>], iteration_bounds = array<i64: 1>, scalar_prefetch = 0 : i64, scratch_operands = 0 : i64, tpu.core_type = #tpu.core_type<tc>, window_params = [{pipeline_mode = #tpu.pipeline_mode<synchronous>, transform_indices = @transform_0, window_bounds = array<i64: 7, 8, 128>}, {pipeline_mode = #tpu.pipeline_mode<synchronous>, transform_indices = @transform_1, window_bounds = array<i64: 128, 128>}, {pipeline_mode = #tpu.pipeline_mode<synchronous>, transform_indices = @transform_2, window_bounds = array<i64: 8, 128>}]} {
    %c0 = arith.constant 0 : index
    %c0_0 = arith.constant 0 : index
    %0 = vector.load %arg2[%c0, %c0_0] : memref<128x128xbf16, #tpu.memory_space<vmem>>, vector<128x128xbf16>
    %cst = arith.constant 0.000000e+00 : f32
    %1 = vector.broadcast %cst : f32 to vector<8x128xf32>
    %cst_1 = arith.constant 0.000000e+00 : bf16
    %2 = vector.broadcast %cst_1 : bf16 to vector<8x128xbf16>
    %c0_i32 = arith.constant 0 : i32
    %3 = arith.index_cast %c0_i32 : i32 to index
    %c0_2 = arith.constant 0 : index
    %c0_3 = arith.constant 0 : index
    %4 = vector.load %arg1[%3, %c0_2, %c0_3] : memref<7x8x128xf32, #tpu.memory_space<vmem>>, vector<1x8x128xf32>
    %5 = vector.shape_cast %4 : vector<1x8x128xf32> to vector<8x128xf32>
    %cst_4 = arith.constant dense<0.000000e+00> : vector<8x128xf32>
    %6 = tpu.matmul %2, %0, %cst_4 {dimension_numbers = #tpu.dot_dimension_numbers<[1], [0], [0], [1], [0, 0, 1, 1], [], []>} : vector<8x128xbf16>, vector<128x128xbf16>, vector<8x128xf32> -> vector<8x128xf32>
    %7 = arith.addf %5, %6 : vector<8x128xf32>
    %cst_5 = arith.constant 1.000000e+02 : f32
    %8 = vector.broadcast %cst_5 : f32 to vector<8x128xf32>
    %9 = arith.cmpf oge, %7, %8 : vector<8x128xf32>
    %10 = arith.extui %9 : vector<8x128xi1> to vector<8x128xi32>
    %11 = arith.sitofp %10 : vector<8x128xi32> to vector<8x128xf32>
    %12 = arith.truncf %11 : vector<8x128xf32> to vector<8x128xbf16>
    %c1_i32 = arith.constant 1 : i32
    %13 = arith.index_cast %c1_i32 : i32 to index
    %c0_6 = arith.constant 0 : index
    %c0_7 = arith.constant 0 : index
    %14 = vector.load %arg1[%13, %c0_6, %c0_7] : memref<7x8x128xf32, #tpu.memory_space<vmem>>, vector<1x8x128xf32>
    %15 = vector.shape_cast %14 : vector<1x8x128xf32> to vector<8x128xf32>
    %cst_8 = arith.constant dense<0.000000e+00> : vector<8x128xf32>
    %16 = tpu.matmul %12, %0, %cst_8 {dimension_numbers = #tpu.dot_dimension_numbers<[1], [0], [0], [1], [0, 0, 1, 1], [], []>} : vector<8x128xbf16>, vector<128x128xbf16>, vector<8x128xf32> -> vector<8x128xf32>
    %17 = arith.addf %15, %16 : vector<8x128xf32>
    %cst_9 = arith.constant 1.000000e+02 : f32
    %18 = vector.broadcast %cst_9 : f32 to vector<8x128xf32>
    %19 = arith.cmpf oge, %17, %18 : vector<8x128xf32>
    %20 = arith.extui %19 : vector<8x128xi1> to vector<8x128xi32>
    %21 = arith.sitofp %20 : vector<8x128xi32> to vector<8x128xf32>
    %22 = arith.truncf %21 : vector<8x128xf32> to vector<8x128xbf16>
    %c2_i32 = arith.constant 2 : i32
    %23 = arith.index_cast %c2_i32 : i32 to index
    %c0_10 = arith.constant 0 : index
    %c0_11 = arith.constant 0 : index
    %24 = vector.load %arg1[%23, %c0_10, %c0_11] : memref<7x8x128xf32, #tpu.memory_space<vmem>>, vector<1x8x128xf32>
    %25 = vector.shape_cast %24 : vector<1x8x128xf32> to vector<8x128xf32>
    %cst_12 = arith.constant dense<0.000000e+00> : vector<8x128xf32>
    %26 = tpu.matmul %22, %0, %cst_12 {dimension_numbers = #tpu.dot_dimension_numbers<[1], [0], [0], [1], [0, 0, 1, 1], [], []>} : vector<8x128xbf16>, vector<128x128xbf16>, vector<8x128xf32> -> vector<8x128xf32>
    %27 = arith.addf %25, %26 : vector<8x128xf32>
    %cst_13 = arith.constant 1.000000e+02 : f32
    %28 = vector.broadcast %cst_13 : f32 to vector<8x128xf32>
    %29 = arith.cmpf oge, %27, %28 : vector<8x128xf32>
    %30 = arith.extui %29 : vector<8x128xi1> to vector<8x128xi32>
    %31 = arith.sitofp %30 : vector<8x128xi32> to vector<8x128xf32>
    %32 = arith.truncf %31 : vector<8x128xf32> to vector<8x128xbf16>
    %c3_i32 = arith.constant 3 : i32
    %33 = arith.index_cast %c3_i32 : i32 to index
    %c0_14 = arith.constant 0 : index
    %c0_15 = arith.constant 0 : index
    %34 = vector.load %arg1[%33, %c0_14, %c0_15] : memref<7x8x128xf32, #tpu.memory_space<vmem>>, vector<1x8x128xf32>
    %35 = vector.shape_cast %34 : vector<1x8x128xf32> to vector<8x128xf32>
    %cst_16 = arith.constant dense<0.000000e+00> : vector<8x128xf32>
    %36 = tpu.matmul %32, %0, %cst_16 {dimension_numbers = #tpu.dot_dimension_numbers<[1], [0], [0], [1], [0, 0, 1, 1], [], []>} : vector<8x128xbf16>, vector<128x128xbf16>, vector<8x128xf32> -> vector<8x128xf32>
    %37 = arith.addf %35, %36 : vector<8x128xf32>
    %cst_17 = arith.constant 1.000000e+02 : f32
    %38 = vector.broadcast %cst_17 : f32 to vector<8x128xf32>
    %39 = arith.cmpf oge, %37, %38 : vector<8x128xf32>
    %40 = arith.extui %39 : vector<8x128xi1> to vector<8x128xi32>
    %41 = arith.sitofp %40 : vector<8x128xi32> to vector<8x128xf32>
    %42 = arith.truncf %41 : vector<8x128xf32> to vector<8x128xbf16>
    %c4_i32 = arith.constant 4 : i32
    %43 = arith.index_cast %c4_i32 : i32 to index
    %c0_18 = arith.constant 0 : index
    %c0_19 = arith.constant 0 : index
    %44 = vector.load %arg1[%43, %c0_18, %c0_19] : memref<7x8x128xf32, #tpu.memory_space<vmem>>, vector<1x8x128xf32>
    %45 = vector.shape_cast %44 : vector<1x8x128xf32> to vector<8x128xf32>
    %cst_20 = arith.constant dense<0.000000e+00> : vector<8x128xf32>
    %46 = tpu.matmul %42, %0, %cst_20 {dimension_numbers = #tpu.dot_dimension_numbers<[1], [0], [0], [1], [0, 0, 1, 1], [], []>} : vector<8x128xbf16>, vector<128x128xbf16>, vector<8x128xf32> -> vector<8x128xf32>
    %47 = arith.addf %45, %46 : vector<8x128xf32>
    %cst_21 = arith.constant 1.000000e+02 : f32
    %48 = vector.broadcast %cst_21 : f32 to vector<8x128xf32>
    %49 = arith.cmpf oge, %47, %48 : vector<8x128xf32>
    %50 = arith.extui %49 : vector<8x128xi1> to vector<8x128xi32>
    %51 = arith.sitofp %50 : vector<8x128xi32> to vector<8x128xf32>
    %52 = arith.truncf %51 : vector<8x128xf32> to vector<8x128xbf16>
    %c5_i32 = arith.constant 5 : i32
    %53 = arith.index_cast %c5_i32 : i32 to index
    %c0_22 = arith.constant 0 : index
    %c0_23 = arith.constant 0 : index
    %54 = vector.load %arg1[%53, %c0_22, %c0_23] : memref<7x8x128xf32, #tpu.memory_space<vmem>>, vector<1x8x128xf32>
    %55 = vector.shape_cast %54 : vector<1x8x128xf32> to vector<8x128xf32>
    %cst_24 = arith.constant dense<0.000000e+00> : vector<8x128xf32>
    %56 = tpu.matmul %52, %0, %cst_24 {dimension_numbers = #tpu.dot_dimension_numbers<[1], [0], [0], [1], [0, 0, 1, 1], [], []>} : vector<8x128xbf16>, vector<128x128xbf16>, vector<8x128xf32> -> vector<8x128xf32>
    %57 = arith.addf %55, %56 : vector<8x128xf32>
    %cst_25 = arith.constant 1.000000e+02 : f32
    %58 = vector.broadcast %cst_25 : f32 to vector<8x128xf32>
    %59 = arith.cmpf oge, %57, %58 : vector<8x128xf32>
    %60 = arith.extui %59 : vector<8x128xi1> to vector<8x128xi32>
    %61 = arith.sitofp %60 : vector<8x128xi32> to vector<8x128xf32>
    %62 = arith.truncf %61 : vector<8x128xf32> to vector<8x128xbf16>
    %c6_i32 = arith.constant 6 : i32
    %63 = arith.index_cast %c6_i32 : i32 to index
    %c0_26 = arith.constant 0 : index
    %c0_27 = arith.constant 0 : index
    %64 = vector.load %arg1[%63, %c0_26, %c0_27] : memref<7x8x128xf32, #tpu.memory_space<vmem>>, vector<1x8x128xf32>
    %65 = vector.shape_cast %64 : vector<1x8x128xf32> to vector<8x128xf32>
    %cst_28 = arith.constant dense<0.000000e+00> : vector<8x128xf32>
    %66 = tpu.matmul %62, %0, %cst_28 {dimension_numbers = #tpu.dot_dimension_numbers<[1], [0], [0], [1], [0, 0, 1, 1], [], []>} : vector<8x128xbf16>, vector<128x128xbf16>, vector<8x128xf32> -> vector<8x128xf32>
    %67 = arith.addf %65, %66 : vector<8x128xf32>
    %cst_29 = arith.constant 1.000000e+02 : f32
    %68 = vector.broadcast %cst_29 : f32 to vector<8x128xf32>
    %69 = arith.cmpf oge, %67, %68 : vector<8x128xf32>
    %70 = arith.extui %69 : vector<8x128xi1> to vector<8x128xi32>
    %71 = arith.sitofp %70 : vector<8x128xi32> to vector<8x128xf32>
    %72 = arith.truncf %71 : vector<8x128xf32> to vector<8x128xbf16>
    %c7_i32 = arith.constant 7 : i32
    %c0_30 = arith.constant 0 : index
    %c0_31 = arith.constant 0 : index
    %73 = vector.load %arg3[%c0_30, %c0_31] : memref<8x128xf32, #tpu.memory_space<vmem>>, vector<8x128xf32>
    tpu.vector_store %arg3[%c0_30, %c0_31], %67 {strides = array<i32>} : memref<8x128xf32, #tpu.memory_space<vmem>>, vector<8x128xf32>,
    return
  }
  func.func @transform_0(%arg0: i32) -> (i32, i32, i32) {
    %c0_i32 = arith.constant 0 : i32
    %c0_i32_0 = arith.constant 0 : i32
    %c0_i32_1 = arith.constant 0 : i32
    %c0_i32_2 = arith.constant 0 : i32
    return %c0_i32, %c0_i32_0, %c0_i32_1 : i32, i32, i32
  }
  func.func @transform_1(%arg0: i32) -> (i32, i32) {
    %c0_i32 = arith.constant 0 : i32
    %c0_i32_0 = arith.constant 0 : i32
    %c0_i32_1 = arith.constant 0 : i32
    return %c0_i32, %c0_i32_0 : i32, i32
  }
  func.func @transform_2(%arg0: i32) -> (i32, i32) {
    %c0_i32 = arith.constant 0 : i32
    %c0_i32_0 = arith.constant 0 : i32
    %c0_i32_1 = arith.constant 0 : i32
    return %c0_i32, %c0_i32_0 : i32, i32
  }
}

</mosaic_0001>

<llo_original>
// kernel: tpu_custom_call.1
$region0: #{tpu_custom_call.1}
  #allocation0 [shape = 'u32[]', space=smem, size = 0x4, offset = 0x4, fixed_abs, tag = 'smem constant byte address 0x4 - core index']
  #allocation1 [shape = 'u32[144,128]{1,0:T(1,128)}', space=vmem, size = 0x12000, scoped, tag = 'internal scratch']
  %s0 = inlined_call_operand.hbm [shape: f32[7,8,128], index: 0, kind: input, shape index: {}]
  %s1 = inlined_call_operand.hbm [shape: bf16[128,128], index: 1, kind: input, shape index: {}]
  %s2 = inlined_call_operand.hbm [shape: f32[8,128], index: 2, kind: output, shape index: {}]
  %s3 = sld [smem:[#allocation0]]
  $region26: #{tpu_custom_call.1} parent=0
    _
  %s5 = ssub.s32 1, %s3
  %s6 = scalar_select 0, %s5, %s3
  $region1: #{tpu_custom_call.1} parent=0
    #allocation2 [shape = 'u8[28672]{0}', space=vmem, size = 0x7000, scoped, tag = 'input window, operand 0, single buffered']
    #allocation3 [shape = 's32[1]{0}', space=sflag, size = 0x4, scoped, tag = 'scoped memory for tpu_custom_call.1']
    #allocation4 [shape = 's32[1]{0}', space=sflag, size = 0x4, scoped, tag = 'scoped memory for tpu_custom_call.1']
    #allocation5 [shape = 'u8[32768]{0}', space=vmem, size = 0x8000, scoped, tag = 'input window, operand 1, single buffered']
    #allocation6 [shape = 's32[1]{0}', space=sflag, size = 0x4, scoped, tag = 'scoped memory for tpu_custom_call.1']
    #allocation7 [shape = 'u8[4096]{0}', space=vmem, size = 0x1000, scoped, tag = 'output window, operand 0, single buffered']
    %7 = vsyncpa [#allocation3], 0
    %8 = vsyncpa [#allocation6], 0
    %9 = vsyncpa [#allocation4], 0
    // Predicated region
    $region2: #{tpu_custom_call.1} parent=1 // pred_check
      _
    $region3: #{tpu_custom_call.1} parent=1 // pred_check_branch
      %11 = sbr.rel (0) target = $region5
    $region4: #{tpu_custom_call.1} parent=1 // pred_region
      %s13 = ssub.s32 896, 896
      %14 = vsyncadd [#allocation3], %s13
      %s15 = sshll.u32 [#allocation2], 4
      %s16 = int_to_ptr.vmem [resolvable:$true] %s15
      %21 = dma.hbm_to_vmem [thread:$0]  %s0, 896, %s16, [#allocation3], 128, 128, 8
    $region5: #{tpu_custom_call.1} parent=1 // pred_fallthru
      _
    // Predicated region
    $region6: #{tpu_custom_call.1} parent=1 // pred_check
      _
    $region7: #{tpu_custom_call.1} parent=1 // pred_check_branch
      %23 = sbr.rel (0) target = $region9
    $region8: #{tpu_custom_call.1} parent=1 // pred_region
      %s25 = ssub.s32 1024, 1024
      %26 = vsyncadd [#allocation6], %s25
      %s27 = sshll.u32 [#allocation5], 4
      %s28 = int_to_ptr.vmem [resolvable:$true] %s27
      %33 = dma.hbm_to_vmem [thread:$0]  %s1, 1024, %s28, [#allocation6], 64, 64, 4
    $region9: #{tpu_custom_call.1} parent=1 // pred_fallthru
      _
    // Predicated region
    $region10: #{tpu_custom_call.1} parent=1 // pred_check
      _
    $region11: #{tpu_custom_call.1} parent=1 // pred_check_branch
      %35 = sbr.rel (0) target = $region13
    $region12: #{tpu_custom_call.1} parent=1 // pred_region
      %36 = dma.done [#allocation3], 896
    $region13: #{tpu_custom_call.1} parent=1 // pred_fallthru
      _
    // Predicated region
    $region14: #{tpu_custom_call.1} parent=1 // pred_check
      _
    $region15: #{tpu_custom_call.1} parent=1 // pred_check_branch
      %38 = sbr.rel (0) target = $region17
    $region16: #{tpu_custom_call.1} parent=1 // pred_region
      %39 = dma.done [#allocation6], 1024
    $region17: #{tpu_custom_call.1} parent=1 // pred_fallthru
      _
    %v41 = vld [vmem:[#allocation5] sm:$0xf]
    %v42 = vld [vmem:[#allocation5 + $0x4] sm:$0xf]
    %v43 = vld [vmem:[#allocation5 + $0x8] sm:$0xf]
    %v44 = vld [vmem:[#allocation5 + $0xc] sm:$0xf]
    %v45 = vld [vmem:[#allocation5 + $0x10] sm:$0xf]
    %v46 = vld [vmem:[#allocation5 + $0x14] sm:$0xf]
    %v47 = vld [vmem:[#allocation5 + $0x18] sm:$0xf]
    %v48 = vld [vmem:[#allocation5 + $0x1c] sm:$0xf]
    %v49 = vld [vmem:[#allocation5 + $0x20] sm:$0xf]
    %v50 = vld [vmem:[#allocation5 + $0x24] sm:$0xf]
    %v51 = vld [vmem:[#allocation5 + $0x28] sm:$0xf]
    %v52 = vld [vmem:[#allocation5 + $0x2c] sm:$0xf]
    %v53 = vld [vmem:[#allocation5 + $0x30] sm:$0xf]
    %v54 = vld [vmem:[#allocation5 + $0x34] sm:$0xf]
    %v55 = vld [vmem:[#allocation5 + $0x38] sm:$0xf]
    %v56 = vld [vmem:[#allocation5 + $0x3c] sm:$0xf]
    %v57 = vld [vmem:[#allocation2] sm:$0xff]
    %v74 = vunpack.c.l.b16 %v41
    %v75 = vunpack.c.l.b16 %v42
    %v76 = vunpack.c.l.b16 %v43
    %v77 = vunpack.c.l.b16 %v44
    %v78 = vunpack.c.l.b16 %v45
    %v79 = vunpack.c.l.b16 %v46
    %v80 = vunpack.c.l.b16 %v47
    %v81 = vunpack.c.l.b16 %v48
    %v82 = vunpack.c.l.b16 %v49
    %v83 = vunpack.c.l.b16 %v50
    %v84 = vunpack.c.l.b16 %v51
    %v85 = vunpack.c.l.b16 %v52
    %v86 = vunpack.c.l.b16 %v53
    %v87 = vunpack.c.l.b16 %v54
    %v88 = vunpack.c.l.b16 %v55
    %v89 = vunpack.c.l.b16 %v56
    %v90 = vpack.c.b16 %v75, %v74
    %v91 = vpack.c.b16 %v77, %v76
    %v92 = vpack.c.b16 %v79, %v78
    %v93 = vpack.c.b16 %v81, %v80
    %v94 = vpack.c.b16 %v83, %v82
    %v95 = vpack.c.b16 %v85, %v84
    %v96 = vpack.c.b16 %v87, %v86
    %v97 = vpack.c.b16 %v89, %v88
    %106 = vmatprep.subr.bf16.mxu0 0
    %107 = vmatpush1.bf16.msra.mxu0 %v97
    %108 = vmatprep.subr.bf16.mxu0 0
    %109 = vmatpush1.bf16.msra.mxu0 %v96
    %110 = vmatprep.subr.bf16.mxu0 0
    %111 = vmatpush1.bf16.msra.mxu0 %v95
    %112 = vmatprep.subr.bf16.mxu0 0
    %113 = vmatpush1.bf16.msra.mxu0 %v94
    %114 = vmatprep.subr.bf16.mxu0 0
    %115 = vmatpush1.bf16.msra.mxu0 %v93
    %116 = vmatprep.subr.bf16.mxu0 0
    %117 = vmatpush1.bf16.msra.mxu0 %v92
    %118 = vmatprep.subr.bf16.mxu0 0
    %119 = vmatpush1.bf16.msra.mxu0 %v91
    %120 = vmatprep.subr.bf16.mxu0 0
    %121 = vmatpush1.bf16.msra.mxu0 %v90
    %122 = vmatprep.subr.bf16.mxu0 0
    %123 = vmatpush2.bf16.msra.mxu0 0
    %124 = vmatprep.subr.bf16.mxu0 0
    %125 = vmatpush2.bf16.msra.mxu0 0
    %126 = vmatprep.subr.bf16.mxu0 0
    %127 = vmatpush2.bf16.msra.mxu0 0
    %128 = vmatprep.subr.bf16.mxu0 0
    %129 = vmatpush2.bf16.msra.mxu0 0
    %130 = vmatprep.subr.bf16.mxu0 0
    %131 = vmatpush2.bf16.msra.mxu0 0
    %132 = vmatprep.subr.bf16.mxu0 0
    %133 = vmatpush2.bf16.msra.mxu0 0
    %134 = vmatprep.subr.bf16.mxu0 0
    %135 = vmatpush2.bf16.msra.mxu0 0
    %136 = vmatprep.subr.bf16.mxu0 0
    %137 = vmatpush2.bf16.msra.mxu0 0
    %138 = vmatprep.mubr.bf16.mxu0 0
    %139 = vmatmul.mubr.bf16.gmra.mxu0 0
    %v140 = vpop.f32.mrf.mxu0
    %v141 = vadd.f32 0.0, %v140
    %v142 = vpop.f32.mrf.mxu0
    %v143 = vpop.f32.mrf.mxu0
    %v144 = vpop.f32.mrf.mxu0
    %145 = vdwg.mxu0
    %v146 = vadd.f32 %v57, %v141
    %vm147 = vcmp.ge.f32.partialorder %v146, 100.0
    %v148 = vsel %vm147, 1, 0
    %v149 = vcvt.s32.f32 %v148
    %v150 = vpack.c.bf16 %v149, %v149
    %s151 = scalar_lea.vmem [#allocation2], 8
    %v152 = vld [vmem:[%s151] sm:$0xff]
    %153 = vmatprep.subr.bf16.mxu0 0
    %154 = vmatpush1.bf16.msra.mxu0 %v97
    %155 = vmatprep.subr.bf16.mxu0 0
    %156 = vmatpush1.bf16.msra.mxu0 %v96
    %157 = vmatprep.subr.bf16.mxu0 0
    %158 = vmatpush1.bf16.msra.mxu0 %v95
    %159 = vmatprep.subr.bf16.mxu0 0
    %160 = vmatpush1.bf16.msra.mxu0 %v94
    %161 = vmatprep.subr.bf16.mxu0 0
    %162 = vmatpush1.bf16.msra.mxu0 %v93
    %163 = vmatprep.subr.bf16.mxu0 0
    %164 = vmatpush1.bf16.msra.mxu0 %v92
    %165 = vmatprep.subr.bf16.mxu0 0
    %166 = vmatpush1.bf16.msra.mxu0 %v91
    %167 = vmatprep.subr.bf16.mxu0 0
    %168 = vmatpush1.bf16.msra.mxu0 %v90
    %169 = vmatprep.subr.bf16.mxu0 0
    %170 = vmatpush2.bf16.msra.mxu0 0
    %171 = vmatprep.subr.bf16.mxu0 0
    %172 = vmatpush2.bf16.msra.mxu0 0
    %173 = vmatprep.subr.bf16.mxu0 0
    %174 = vmatpush2.bf16.msra.mxu0 0
    %175 = vmatprep.subr.bf16.mxu0 0
    %176 = vmatpush2.bf16.msra.mxu0 0
    %177 = vmatprep.subr.bf16.mxu0 0
    %178 = vmatpush2.bf16.msra.mxu0 0
    %179 = vmatprep.subr.bf16.mxu0 0
    %180 = vmatpush2.bf16.msra.mxu0 0
    %181 = vmatprep.subr.bf16.mxu0 0
    %182 = vmatpush2.bf16.msra.mxu0 0
    %183 = vmatprep.subr.bf16.mxu0 0
    %184 = vmatpush2.bf16.msra.mxu0 0
    %185 = vmatprep.mubr.bf16.mxu0 0
    %186 = vmatmul.mubr.bf16.gmra.mxu0 %v150
    %v187 = vpop.f32.mrf.mxu0
    %v188 = vadd.f32 0.0, %v187
    %v189 = vpop.f32.mrf.mxu0
    %v190 = vpop.f32.mrf.mxu0
    %v191 = vpop.f32.mrf.mxu0
    %192 = vdwg.mxu0
    %v193 = vadd.f32 %v152, %v188
    %vm194 = vcmp.ge.f32.partialorder %v193, 100.0
    %v195 = vsel %vm194, 1, 0
    %v196 = vcvt.s32.f32 %v195
    %v197 = vpack.c.bf16 %v196, %v196
    %s198 = scalar_lea.vmem [#allocation2], 16
    %v199 = vld [vmem:[%s198] sm:$0xff]
    %200 = vmatprep.subr.bf16.mxu0 0
    %201 = vmatpush1.bf16.msra.mxu0 %v97
    %202 = vmatprep.subr.bf16.mxu0 0
    %203 = vmatpush1.bf16.msra.mxu0 %v96
    %204 = vmatprep.subr.bf16.mxu0 0
    %205 = vmatpush1.bf16.msra.mxu0 %v95
    %206 = vmatprep.subr.bf16.mxu0 0
    %207 = vmatpush1.bf16.msra.mxu0 %v94
    %208 = vmatprep.subr.bf16.mxu0 0
    %209 = vmatpush1.bf16.msra.mxu0 %v93
    %210 = vmatprep.subr.bf16.mxu0 0
    %211 = vmatpush1.bf16.msra.mxu0 %v92
    %212 = vmatprep.subr.bf16.mxu0 0
    %213 = vmatpush1.bf16.msra.mxu0 %v91
    %214 = vmatprep.subr.bf16.mxu0 0
    %215 = vmatpush1.bf16.msra.mxu0 %v90
    %216 = vmatprep.subr.bf16.mxu0 0
    %217 = vmatpush2.bf16.msra.mxu0 0
    %218 = vmatprep.subr.bf16.mxu0 0
    %219 = vmatpush2.bf16.msra.mxu0 0
    %220 = vmatprep.subr.bf16.mxu0 0
    %221 = vmatpush2.bf16.msra.mxu0 0
    %222 = vmatprep.subr.bf16.mxu0 0
    %223 = vmatpush2.bf16.msra.mxu0 0
    %224 = vmatprep.subr.bf16.mxu0 0
    %225 = vmatpush2.bf16.msra.mxu0 0
    %226 = vmatprep.subr.bf16.mxu0 0
    %227 = vmatpush2.bf16.msra.mxu0 0
    %228 = vmatprep.subr.bf16.mxu0 0
    %229 = vmatpush2.bf16.msra.mxu0 0
    %230 = vmatprep.subr.bf16.mxu0 0
    %231 = vmatpush2.bf16.msra.mxu0 0
    %232 = vmatprep.mubr.bf16.mxu0 0
    %233 = vmatmul.mubr.bf16.gmra.mxu0 %v197
    %v234 = vpop.f32.mrf.mxu0
    %v235 = vadd.f32 0.0, %v234
    %v236 = vpop.f32.mrf.mxu0
    %v237 = vpop.f32.mrf.mxu0
    %v238 = vpop.f32.mrf.mxu0
    %239 = vdwg.mxu0
    %v240 = vadd.f32 %v199, %v235
    %vm241 = vcmp.ge.f32.partialorder %v240, 100.0
    %v242 = vsel %vm241, 1, 0
    %v243 = vcvt.s32.f32 %v242
    %v244 = vpack.c.bf16 %v243, %v243
    %s245 = scalar_lea.vmem [#allocation2], 24
    %v246 = vld [vmem:[%s245] sm:$0xff]
    %247 = vmatprep.subr.bf16.mxu0 0
    %248 = vmatpush1.bf16.msra.mxu0 %v97
    %249 = vmatprep.subr.bf16.mxu0 0
    %250 = vmatpush1.bf16.msra.mxu0 %v96
    %251 = vmatprep.subr.bf16.mxu0 0
    %252 = vmatpush1.bf16.msra.mxu0 %v95
    %253 = vmatprep.subr.bf16.mxu0 0
    %254 = vmatpush1.bf16.msra.mxu0 %v94
    %255 = vmatprep.subr.bf16.mxu0 0
    %256 = vmatpush1.bf16.msra.mxu0 %v93
    %257 = vmatprep.subr.bf16.mxu0 0
    %258 = vmatpush1.bf16.msra.mxu0 %v92
    %259 = vmatprep.subr.bf16.mxu0 0
    %260 = vmatpush1.bf16.msra.mxu0 %v91
    %261 = vmatprep.subr.bf16.mxu0 0
    %262 = vmatpush1.bf16.msra.mxu0 %v90
    %263 = vmatprep.subr.bf16.mxu0 0
    %264 = vmatpush2.bf16.msra.mxu0 0
    %265 = vmatprep.subr.bf16.mxu0 0
    %266 = vmatpush2.bf16.msra.mxu0 0
    %267 = vmatprep.subr.bf16.mxu0 0
    %268 = vmatpush2.bf16.msra.mxu0 0
    %269 = vmatprep.subr.bf16.mxu0 0
    %270 = vmatpush2.bf16.msra.mxu0 0
    %271 = vmatprep.subr.bf16.mxu0 0
    %272 = vmatpush2.bf16.msra.mxu0 0
    %273 = vmatprep.subr.bf16.mxu0 0
    %274 = vmatpush2.bf16.msra.mxu0 0
    %275 = vmatprep.subr.bf16.mxu0 0
    %276 = vmatpush2.bf16.msra.mxu0 0
    %277 = vmatprep.subr.bf16.mxu0 0
    %278 = vmatpush2.bf16.msra.mxu0 0
    %279 = vmatprep.mubr.bf16.mxu0 0
    %280 = vmatmul.mubr.bf16.gmra.mxu0 %v244
    %v281 = vpop.f32.mrf.mxu0
    %v282 = vadd.f32 0.0, %v281
    %v283 = vpop.f32.mrf.mxu0
    %v284 = vpop.f32.mrf.mxu0
    %v285 = vpop.f32.mrf.mxu0
    %286 = vdwg.mxu0
    %v287 = vadd.f32 %v246, %v282
    %vm288 = vcmp.ge.f32.partialorder %v287, 100.0
    %v289 = vsel %vm288, 1, 0
    %v290 = vcvt.s32.f32 %v289
    %v291 = vpack.c.bf16 %v290, %v290
    %s292 = scalar_lea.vmem [#allocation2], 32
    %v293 = vld [vmem:[%s292] sm:$0xff]
    %294 = vmatprep.subr.bf16.mxu0 0
    %295 = vmatpush1.bf16.msra.mxu0 %v97
    %296 = vmatprep.subr.bf16.mxu0 0
    %297 = vmatpush1.bf16.msra.mxu0 %v96
    %298 = vmatprep.subr.bf16.mxu0 0
    %299 = vmatpush1.bf16.msra.mxu0 %v95
    %300 = vmatprep.subr.bf16.mxu0 0
    %301 = vmatpush1.bf16.msra.mxu0 %v94
    %302 = vmatprep.subr.bf16.mxu0 0
    %303 = vmatpush1.bf16.msra.mxu0 %v93
    %304 = vmatprep.subr.bf16.mxu0 0
    %305 = vmatpush1.bf16.msra.mxu0 %v92
    %306 = vmatprep.subr.bf16.mxu0 0
    %307 = vmatpush1.bf16.msra.mxu0 %v91
    %308 = vmatprep.subr.bf16.mxu0 0
    %309 = vmatpush1.bf16.msra.mxu0 %v90
    %310 = vmatprep.subr.bf16.mxu0 0
    %311 = vmatpush2.bf16.msra.mxu0 0
    %312 = vmatprep.subr.bf16.mxu0 0
    %313 = vmatpush2.bf16.msra.mxu0 0
    %314 = vmatprep.subr.bf16.mxu0 0
    %315 = vmatpush2.bf16.msra.mxu0 0
    %316 = vmatprep.subr.bf16.mxu0 0
    %317 = vmatpush2.bf16.msra.mxu0 0
    %318 = vmatprep.subr.bf16.mxu0 0
    %319 = vmatpush2.bf16.msra.mxu0 0
    %320 = vmatprep.subr.bf16.mxu0 0
    %321 = vmatpush2.bf16.msra.mxu0 0
    %322 = vmatprep.subr.bf16.mxu0 0
    %323 = vmatpush2.bf16.msra.mxu0 0
    %324 = vmatprep.subr.bf16.mxu0 0
    %325 = vmatpush2.bf16.msra.mxu0 0
    %326 = vmatprep.mubr.bf16.mxu0 0
    %327 = vmatmul.mubr.bf16.gmra.mxu0 %v291
    %v328 = vpop.f32.mrf.mxu0
    %v329 = vadd.f32 0.0, %v328
    %v330 = vpop.f32.mrf.mxu0
    %v331 = vpop.f32.mrf.mxu0
    %v332 = vpop.f32.mrf.mxu0
    %333 = vdwg.mxu0
    %v334 = vadd.f32 %v293, %v329
    %vm335 = vcmp.ge.f32.partialorder %v334, 100.0
    %v336 = vsel %vm335, 1, 0
    %v337 = vcvt.s32.f32 %v336
    %v338 = vpack.c.bf16 %v337, %v337
    %s339 = scalar_lea.vmem [#allocation2], 40
    %v340 = vld [vmem:[%s339] sm:$0xff]
    %341 = vmatprep.subr.bf16.mxu0 0
    %342 = vmatpush1.bf16.msra.mxu0 %v97
    %343 = vmatprep.subr.bf16.mxu0 0
    %344 = vmatpush1.bf16.msra.mxu0 %v96
    %345 = vmatprep.subr.bf16.mxu0 0
    %346 = vmatpush1.bf16.msra.mxu0 %v95
    %347 = vmatprep.subr.bf16.mxu0 0
    %348 = vmatpush1.bf16.msra.mxu0 %v94
    %349 = vmatprep.subr.bf16.mxu0 0
    %350 = vmatpush1.bf16.msra.mxu0 %v93
    %351 = vmatprep.subr.bf16.mxu0 0
    %352 = vmatpush1.bf16.msra.mxu0 %v92
    %353 = vmatprep.subr.bf16.mxu0 0
    %354 = vmatpush1.bf16.msra.mxu0 %v91
    %355 = vmatprep.subr.bf16.mxu0 0
    %356 = vmatpush1.bf16.msra.mxu0 %v90
    %357 = vmatprep.subr.bf16.mxu0 0
    %358 = vmatpush2.bf16.msra.mxu0 0
    %359 = vmatprep.subr.bf16.mxu0 0
    %360 = vmatpush2.bf16.msra.mxu0 0
    %361 = vmatprep.subr.bf16.mxu0 0
    %362 = vmatpush2.bf16.msra.mxu0 0
    %363 = vmatprep.subr.bf16.mxu0 0
    %364 = vmatpush2.bf16.msra.mxu0 0
    %365 = vmatprep.subr.bf16.mxu0 0
    %366 = vmatpush2.bf16.msra.mxu0 0
    %367 = vmatprep.subr.bf16.mxu0 0
    %368 = vmatpush2.bf16.msra.mxu0 0
    %369 = vmatprep.subr.bf16.mxu0 0
    %370 = vmatpush2.bf16.msra.mxu0 0
    %371 = vmatprep.subr.bf16.mxu0 0
    %372 = vmatpush2.bf16.msra.mxu0 0
    %373 = vmatprep.mubr.bf16.mxu0 0
    %374 = vmatmul.mubr.bf16.gmra.mxu0 %v338
    %v375 = vpop.f32.mrf.mxu0
    %v376 = vadd.f32 0.0, %v375
    %v377 = vpop.f32.mrf.mxu0
    %v378 = vpop.f32.mrf.mxu0
    %v379 = vpop.f32.mrf.mxu0
    %380 = vdwg.mxu0
    %v381 = vadd.f32 %v340, %v376
    %vm382 = vcmp.ge.f32.partialorder %v381, 100.0
    %v383 = vsel %vm382, 1, 0
    %v384 = vcvt.s32.f32 %v383
    %v385 = vpack.c.bf16 %v384, %v384
    %s386 = scalar_lea.vmem [#allocation2], 48
    %v387 = vld [vmem:[%s386] sm:$0xff]
    %388 = vmatprep.subr.bf16.mxu0 0
    %389 = vmatpush1.bf16.msra.mxu0 %v97
    %390 = vmatprep.subr.bf16.mxu0 0
    %391 = vmatpush1.bf16.msra.mxu0 %v96
    %392 = vmatprep.subr.bf16.mxu0 0
    %393 = vmatpush1.bf16.msra.mxu0 %v95
    %394 = vmatprep.subr.bf16.mxu0 0
    %395 = vmatpush1.bf16.msra.mxu0 %v94
    %396 = vmatprep.subr.bf16.mxu0 0
    %397 = vmatpush1.bf16.msra.mxu0 %v93
    %398 = vmatprep.subr.bf16.mxu0 0
    %399 = vmatpush1.bf16.msra.mxu0 %v92
    %400 = vmatprep.subr.bf16.mxu0 0
    %401 = vmatpush1.bf16.msra.mxu0 %v91
    %402 = vmatprep.subr.bf16.mxu0 0
    %403 = vmatpush1.bf16.msra.mxu0 %v90
    %404 = vmatprep.subr.bf16.mxu0 0
    %405 = vmatpush2.bf16.msra.mxu0 0
    %406 = vmatprep.subr.bf16.mxu0 0
    %407 = vmatpush2.bf16.msra.mxu0 0
    %408 = vmatprep.subr.bf16.mxu0 0
    %409 = vmatpush2.bf16.msra.mxu0 0
    %410 = vmatprep.subr.bf16.mxu0 0
    %411 = vmatpush2.bf16.msra.mxu0 0
    %412 = vmatprep.subr.bf16.mxu0 0
    %413 = vmatpush2.bf16.msra.mxu0 0
    %414 = vmatprep.subr.bf16.mxu0 0
    %415 = vmatpush2.bf16.msra.mxu0 0
    %416 = vmatprep.subr.bf16.mxu0 0
    %417 = vmatpush2.bf16.msra.mxu0 0
    %418 = vmatprep.subr.bf16.mxu0 0
    %419 = vmatpush2.bf16.msra.mxu0 0
    %420 = vmatprep.mubr.bf16.mxu0 0
    %421 = vmatmul.mubr.bf16.gmra.mxu0 %v385
    %v422 = vpop.f32.mrf.mxu0
    %v423 = vadd.f32 0.0, %v422
    %v424 = vpop.f32.mrf.mxu0
    %v425 = vpop.f32.mrf.mxu0
    %v426 = vpop.f32.mrf.mxu0
    %427 = vdwg.mxu0
    %v428 = vadd.f32 %v387, %v423
    %429 = vst [vmem:[#allocation7] sm:$0xff] %v428
    // Predicated region
    $region18: #{tpu_custom_call.1} parent=1 // pred_check
      _
    $region19: #{tpu_custom_call.1} parent=1 // pred_check_branch
      %431 = sbr.rel (0) target = $region21
    $region20: #{tpu_custom_call.1} parent=1 // pred_region
      %s433 = ssub.s32 128, 128
      %434 = vsyncadd [#allocation4], %s433
      %s436 = sshll.u32 [#allocation7], 4
      %s437 = int_to_ptr.vmem [resolvable:$true] %s436
      %439 = dma.vmem_to_hbm [thread:$0]  %s437, 128, %s2, [#allocation4]
    $region21: #{tpu_custom_call.1} parent=1 // pred_fallthru
      _
    // Predicated region
    $region22: #{tpu_custom_call.1} parent=1 // pred_check
      _
    $region23: #{tpu_custom_call.1} parent=1 // pred_check_branch
      %441 = sbr.rel (0) target = $region25
    $region24: #{tpu_custom_call.1} parent=1 // pred_region
      %442 = dma.done [#allocation4], 128
    $region25: #{tpu_custom_call.1} parent=1 // pred_fallthru
      _
    %443 = vsyncpa [#allocation3], 1
    %444 = vsyncpa [#allocation6], 1
    %445 = vsyncpa [#allocation4], 1

</llo_original>
